<compile_context>
chip_gen: v5e
topology: v5e:2x2
jax: 0.10.0
libtpu: 0.0.40
codegen_flags: <defaults>
</compile_context>

<pallas_src>
import functools

import jax
import jax.numpy as jnp
from jax.experimental import pallas as pl
from jax.experimental.pallas import tpu as pltpu

_OUT_ROWS = 8  # logit dim (2) padded to one sublane group in the transposed output


def _round_up(x, m):
    return ((x + m - 1) // m) * m


def _classify_header3_kernel(nl_ref, plh_ref, w1_ref, b1_ref, w2t_ref, b2t_ref,
                             out_ref):
    """Fused: elementwise mul -> dense -> sigmoid -> (eval dropout) -> dense^T."""
    # torch.mul(nl_hidden, pl_hidden) in f32 (v5e VPU has no bf16); the MXU
    # operand is then cast to the weight compute dtype (bf16, f32 accumulate).
    multi = nl_ref[...].astype(jnp.float32) * plh_ref[...].astype(jnp.float32)

    # self.dense(multi_hidden): (tb, d_in) @ (d_in, d_mid) -> f32, f32 bias.
    fuse = jnp.dot(multi.astype(w1_ref.dtype), w1_ref[...],
                   preferred_element_type=jnp.float32) + b1_ref[...]

    # self.sigmoid(fuse_hidden): exact (exp on EUP + exact f32 divide); the
    # kernel is HBM-bound so the exact form costs nothing over an approx rcp.
    sig = 1.0 / (1.0 + jnp.exp(-fuse))

    # self.dropout(...): eval-mode identity (p=0.2 only active in training).
    # TODO(synk): training-mode dropout would use pltpu.prng_seed +
    #             pltpu.stateful_bernoulli; omitted for inference semantics.

    # self.output_layer(sigmoid_hidden), produced transposed:
    #   (8, d_mid) @ (d_mid, tb) -> (8, tb)   [batch on lanes -> lane-dense vst]
    # The sig transpose rides the XLU slot (slack under the HBM-bound regime).
    sig_t = jnp.transpose(sig).astype(w2t_ref.dtype)
    logits_t = jnp.dot(w2t_ref[...], sig_t,
                       preferred_element_type=jnp.float32) + b2t_ref[...]
    out_ref[...] = logits_t


def _choose_tile_b(B, tile_b):
    """Batch tile: the batch dim is the lane axis of the transposed output
    block, so tb must be a multiple of 128 (or equal B).  Large enough to
    amortize the ~0.35us per-grid-step overhead, capped so the grid has >= 2
    steps whenever possible (keeps both v7x TensorCores busy)."""
    if B <= 128:
        return B                                   # single full-dim block
    half = _round_up(pl.cdiv(B, 2), 128)           # guarantees >= 2 grid steps
    return max(128, min(_round_up(tile_b, 128), half))


def _vmem_limit_bytes(tb, d_in, d_mid, in_itemsize, w_itemsize):
    """VMEM budget from the actual resident footprint, capped to chip VMEM."""
    # Resident weights/biases (double-buffered by the default pipeliner).
    # TODO(synk): single-buffer these (pipeline_mode=pl.Buffered(1)) and/or
    #             tile w1 along d_mid for very large hidden sizes on v7x.
    weights = 2 * ((d_in * d_mid + _OUT_ROWS * d_mid) * w_itemsize
                   + (d_mid + _OUT_ROWS * 128) * 4)
    # Streamed activation / output tiles, double-buffered.
    acts = 2 * (2 * tb * d_in * in_itemsize + _OUT_ROWS * tb * 4)
    # In-kernel intermediates (multi / fuse / sig / sig_t) + headroom.
    inter = 4 * tb * d_mid * 4 + (2 << 20)
    need = weights + acts + inter

    try:  # generation-aware cap: 64 MiB/TC on v7x, 128 MiB on v5e/v6e
        cap = int(pltpu.get_tpu_info().vmem_capacity_bytes)
    except Exception:
        cap = 64 << 20
    cap = max(cap - (12 << 20), 32 << 20)   # headroom for Mosaic internal scratch
    return int(min(max(need, 16 << 20), cap))


def classify_header3_forward(nl_hidden, pl_hidden, params, *, tile_b=512):
    """Batch-tiled fused forward. Returns (B, 2) logits in float32."""
    w1, b1 = params["w1_c"], params["b1_c"]
    w2t, b2t = params["w2t_c"], params["b2t_c"]
    B, d_in = nl_hidden.shape
    d_mid = w1.shape[1]

    tb = _choose_tile_b(B, tile_b)
    grid = (pl.cdiv(B, tb),)       # ragged final tile handled by masked stores
    vmem_bytes = _vmem_limit_bytes(tb, d_in, d_mid,
                                   nl_hidden.dtype.itemsize, w1.dtype.itemsize)
    cost = pl.CostEstimate(
        flops=2 * B * d_mid * (d_in + _OUT_ROWS) + B * (d_in + 2 * d_mid),
        transcendentals=B * d_mid,
        bytes_accessed=(2 * B * d_in * nl_hidden.dtype.itemsize
                        + (d_in + _OUT_ROWS) * d_mid * w1.dtype.itemsize
                        + (d_mid + _OUT_ROWS) * 4
                        + _OUT_ROWS * B * 4),
    )

    logits_t = pl.pallas_call(
        _classify_header3_kernel,
        out_shape=jax.ShapeDtypeStruct((_OUT_ROWS, B), jnp.float32),
        grid_spec=pltpu.PrefetchScalarGridSpec(
            num_scalar_prefetch=0,
            grid=grid,
            in_specs=[
                # streamed activation tiles (batch on sublanes)
                pl.BlockSpec((tb, d_in), lambda i: (i, 0)),
                pl.BlockSpec((tb, d_in), lambda i: (i, 0)),
                # VMEM-resident weights / biases (constant block index)
                pl.BlockSpec((d_in, d_mid), lambda i: (0, 0)),
                pl.BlockSpec((1, d_mid), lambda i: (0, 0)),
                pl.BlockSpec((_OUT_ROWS, d_mid), lambda i: (0, 0)),
                pl.BlockSpec((_OUT_ROWS, 1), lambda i: (0, 0)),
            ],
            # transposed, lane-dense output block: batch on the lane axis
            out_specs=pl.BlockSpec((_OUT_ROWS, tb), lambda i: (0, i)),
        ),
        compiler_params=pltpu.CompilerParams(
            dimension_semantics=("parallel",),   # shard batch steps across TCs
            vmem_limit_bytes=vmem_bytes,
        ),
        cost_estimate=cost,
    )(nl_hidden, pl_hidden, w1, b1, w2t, b2t)

    # Consumers that accept the transposed (8, B) slab can skip this; the
    # slice + transpose only touch 2*B floats.
    return logits_t[:2, :].T


def init_params(key, hidden_size, rnn_type, compute_dtype=jnp.bfloat16):
    """Init matching the module's __init__ shapes.

    dense:        Linear(hidden*bi,   hidden*2*bi)
    output_layer: Linear(hidden*2*bi, 2)
    Kernel weights are stored pre-cast to the MXU compute dtype; the output
    layer is stored transposed, (out, in), padded to 8 sublane rows, so no
    per-call padding / reshape work happens in the forward wrapper.
    """
    bi = 2 if rnn_type == "bi_gru" else 1
    d_in = hidden_size * bi
    d_mid = hidden_size * 2 * bi
    k1, k2, k3, k4 = jax.random.split(key, 4)
    lim1 = 1.0 / jnp.sqrt(d_in)
    lim2 = 1.0 / jnp.sqrt(d_mid)

    w1 = jax.random.uniform(k1, (d_in, d_mid), jnp.float32, -lim1, lim1)
    b1 = jax.random.uniform(k2, (d_mid,), jnp.float32, -lim1, lim1)
    w2 = jax.random.uniform(k3, (d_mid, 2), jnp.float32, -lim2, lim2)
    b2 = jax.random.uniform(k4, (2,), jnp.float32, -lim2, lim2)

    w2t_pad = jnp.zeros((_OUT_ROWS, d_mid), jnp.float32).at[:2, :].set(w2.T)
    b2t_pad = jnp.zeros((_OUT_ROWS, 1), jnp.float32).at[:2, 0].set(b2)

    return {
        # kernel-ready (pre-padded / pre-cast / pre-transposed), built once
        "w1_c": w1.astype(compute_dtype),
        "b1_c": b1.reshape(1, -1),             # f32 broadcast row
        "w2t_c": w2t_pad.astype(compute_dtype),
        "b2t_c": b2t_pad,                      # f32 (8, 1) broadcast column
        # f32 originals for the pure-JAX reference
        "w1": w1, "b1": b1, "w2": w2, "b2": b2,
    }


def reference_forward(nl_hidden, pl_hidden, params):
    """Pure-JAX f32 reference mirroring the PyTorch forward (eval mode)."""
    multi = nl_hidden * pl_hidden
    fuse = multi @ params["w1"] + params["b1"]
    sig = jax.nn.sigmoid(fuse)
    return sig @ params["w2"] + params["b2"]


if __name__ == "__main__":
    hidden_size = 32
    rnn_type = "bi_gru"            # bi = 2 -> feature dim = 64, mid = 128
    bi = 2
    batch = 200                    # non-tile-multiple: exercises ragged tile + 2-step grid

    key = jax.random.PRNGKey(0)
    kp, ka, kb = jax.random.split(key, 3)
    params = init_params(kp, hidden_size, rnn_type)

    nl_hidden = jax.random.normal(ka, (batch, hidden_size * bi), jnp.float32)
    pl_hidden = jax.random.normal(kb, (batch, hidden_size * bi), jnp.float32)

    fwd = jax.jit(functools.partial(classify_header3_forward, params=params))
    logits = jax.block_until_ready(fwd(nl_hidden, pl_hidden))

    ref = reference_forward(nl_hidden, pl_hidden, params)
    assert logits.shape == (batch, 2), logits.shape
    # bf16 MXU operands (f32 accumulation, exact sigmoid) vs. pure-f32 reference.
    assert jnp.allclose(logits, ref, atol=2e-2, rtol=2e-2), (
        "mismatch vs. pure-JAX reference")

    print("KERNEL_OK")
</pallas_src>

<mosaic_0001>
module attributes {stable_mosaic.version = 11 : i64} {
  func.func @_classify_header3_kernel(%arg0: i32, %arg1: memref<128x64xf32, #tpu.memory_space<vmem>>, %arg2: memref<128x64xf32, #tpu.memory_space<vmem>>, %arg3: memref<64x128xbf16, #tpu.memory_space<vmem>>, %arg4: memref<1x128xf32, #tpu.memory_space<vmem>>, %arg5: memref<8x128xbf16, #tpu.memory_space<vmem>>, %arg6: memref<8x1xf32, #tpu.memory_space<vmem>>, %arg7: memref<8x128xf32, #tpu.memory_space<vmem>>) attributes {dimension_semantics = [#tpu.dimension_semantics<parallel>], iteration_bounds = array<i64: 2>, scalar_prefetch = 0 : i64, scratch_operands = 0 : i64, tpu.core_type = #tpu.core_type<tc>, window_params = [{transform_indices = @transform_0, window_bounds = array<i64: 128, 64>}, {transform_indices = @transform_1, window_bounds = array<i64: 128, 64>}, {pipeline_mode = #tpu.pipeline_mode<synchronous>, transform_indices = @transform_2, window_bounds = array<i64: 64, 128>}, {pipeline_mode = #tpu.pipeline_mode<synchronous>, transform_indices = @transform_3, window_bounds = array<i64: 1, 128>}, {pipeline_mode = #tpu.pipeline_mode<synchronous>, transform_indices = @transform_4, window_bounds = array<i64: 8, 128>}, {pipeline_mode = #tpu.pipeline_mode<synchronous>, transform_indices = @transform_5, window_bounds = array<i64: 8, 1>}, {transform_indices = @transform_6, window_bounds = array<i64: 8, 128>}]} {
    %c0 = arith.constant 0 : index
    %c0_0 = arith.constant 0 : index
    %0 = vector.load %arg1[%c0, %c0_0] : memref<128x64xf32, #tpu.memory_space<vmem>>, vector<128x64xf32>
    %c0_1 = arith.constant 0 : index
    %c0_2 = arith.constant 0 : index
    %1 = vector.load %arg2[%c0_1, %c0_2] : memref<128x64xf32, #tpu.memory_space<vmem>>, vector<128x64xf32>
    %2 = arith.mulf %0, %1 : vector<128x64xf32>
    %3 = arith.truncf %2 : vector<128x64xf32> to vector<128x64xbf16>
    %c0_3 = arith.constant 0 : index
    %c0_4 = arith.constant 0 : index
    %4 = vector.load %arg3[%c0_3, %c0_4] : memref<64x128xbf16, #tpu.memory_space<vmem>>, vector<64x128xbf16>
    %cst = arith.constant dense<0.000000e+00> : vector<128x128xf32>
    %5 = tpu.matmul %3, %4, %cst {dimension_numbers = #tpu.dot_dimension_numbers<[1], [0], [0], [1], [0, 0, 1, 1], [], []>} : vector<128x64xbf16>, vector<64x128xbf16>, vector<128x128xf32> -> vector<128x128xf32>
    %c0_5 = arith.constant 0 : index
    %c0_6 = arith.constant 0 : index
    %6 = vector.load %arg4[%c0_5, %c0_6] : memref<1x128xf32, #tpu.memory_space<vmem>>, vector<1x128xf32>
    %7 = vector.broadcast %6 : vector<1x128xf32> to vector<128x128xf32>
    %8 = arith.addf %5, %7 : vector<128x128xf32>
    %cst_7 = arith.constant 0.000000e+00 : f32
    %9 = vector.broadcast %cst_7 : f32 to vector<128x128xf32>
    %10 = arith.subf %9, %8 : vector<128x128xf32>
    %11 = math.exp %10 : vector<128x128xf32>
    %cst_8 = arith.constant 1.000000e+00 : f32
    %12 = vector.broadcast %cst_8 : f32 to vector<128x128xf32>
    %13 = arith.addf %12, %11 : vector<128x128xf32>
    %cst_9 = arith.constant 1.000000e+00 : f32
    %14 = vector.broadcast %cst_9 : f32 to vector<128x128xf32>
    %15 = arith.divf %14, %13 : vector<128x128xf32>
    %16 = tpu.transpose %15, [1, 0] : vector<128x128xf32> -> vector<128x128xf32>
    %17 = arith.truncf %16 : vector<128x128xf32> to vector<128x128xbf16>
    %c0_10 = arith.constant 0 : index
    %c0_11 = arith.constant 0 : index
    %18 = vector.load %arg5[%c0_10, %c0_11] : memref<8x128xbf16, #tpu.memory_space<vmem>>, vector<8x128xbf16>
    %cst_12 = arith.constant dense<0.000000e+00> : vector<8x128xf32>
    %19 = tpu.matmul %18, %17, %cst_12 {dimension_numbers = #tpu.dot_dimension_numbers<[1], [0], [0], [1], [0, 0, 1, 1], [], []>} : vector<8x128xbf16>, vector<128x128xbf16>, vector<8x128xf32> -> vector<8x128xf32>
    %c0_13 = arith.constant 0 : index
    %c0_14 = arith.constant 0 : index
    %20 = vector.load %arg6[%c0_13, %c0_14] : memref<8x1xf32, #tpu.memory_space<vmem>>, vector<8x1xf32>
    %21 = vector.broadcast %20 : vector<8x1xf32> to vector<8x128xf32>
    %22 = arith.addf %19, %21 : vector<8x128xf32>
    %c0_15 = arith.constant 0 : index
    %c0_16 = arith.constant 0 : index
    %23 = vector.load %arg7[%c0_15, %c0_16] : memref<8x128xf32, #tpu.memory_space<vmem>>, vector<8x128xf32>
    tpu.vector_store %arg7[%c0_15, %c0_16], %22 {strides = array<i32>} : memref<8x128xf32, #tpu.memory_space<vmem>>, vector<8x128xf32>,
    return
  }
  func.func @transform_0(%arg0: i32) -> (i32, i32) {
    %c0_i32 = arith.constant 0 : i32
    %c0_i32_0 = arith.constant 0 : i32
    return %arg0, %c0_i32 : i32, i32
  }
  func.func @transform_1(%arg0: i32) -> (i32, i32) {
    %c0_i32 = arith.constant 0 : i32
    %c0_i32_0 = arith.constant 0 : i32
    return %arg0, %c0_i32 : i32, i32
  }
  func.func @transform_2(%arg0: i32) -> (i32, i32) {
    %c0_i32 = arith.constant 0 : i32
    %c0_i32_0 = arith.constant 0 : i32
    %c0_i32_1 = arith.constant 0 : i32
    return %c0_i32, %c0_i32_0 : i32, i32
  }
  func.func @transform_3(%arg0: i32) -> (i32, i32) {
    %c0_i32 = arith.constant 0 : i32
    %c0_i32_0 = arith.constant 0 : i32
    %c0_i32_1 = arith.constant 0 : i32
    return %c0_i32, %c0_i32_0 : i32, i32
  }
  func.func @transform_4(%arg0: i32) -> (i32, i32) {
    %c0_i32 = arith.constant 0 : i32
    %c0_i32_0 = arith.constant 0 : i32
    %c0_i32_1 = arith.constant 0 : i32
    return %c0_i32, %c0_i32_0 : i32, i32
  }
  func.func @transform_5(%arg0: i32) -> (i32, i32) {
    %c0_i32 = arith.constant 0 : i32
    %c0_i32_0 = arith.constant 0 : i32
    %c0_i32_1 = arith.constant 0 : i32
    return %c0_i32, %c0_i32_0 : i32, i32
  }
  func.func @transform_6(%arg0: i32) -> (i32, i32) {
    %c0_i32 = arith.constant 0 : i32
    %c0_i32_0 = arith.constant 0 : i32
    return %c0_i32, %arg0 : i32, i32
  }
}

</mosaic_0001>

<llo_original>
// kernel: classify_header3_forward.1
$region0: #{classify_header3_forward.1}
  #allocation0 [shape = 'u32[]', space=smem, size = 0x4, offset = 0x4, fixed_abs, tag = 'smem constant byte address 0x4 - core index']
  #allocation1 [shape = 'u32[72,128]{1,0:T(1,128)}', space=vmem, size = 0x9000, scoped, tag = 'internal scratch']
  %s0 = inlined_call_operand.vmem [shape: f32[200,64], index: 0, kind: input, shape index: {}]
  %s1 = inlined_call_operand.vmem [shape: f32[200,64], index: 1, kind: input, shape index: {}]
  %s2 = inlined_call_operand.vmem [shape: bf16[64,128], index: 2, kind: input, shape index: {}]
  %s3 = inlined_call_operand.vmem [shape: f32[1,128], index: 3, kind: input, shape index: {}]
  %s4 = inlined_call_operand.vmem [shape: bf16[8,128], index: 4, kind: input, shape index: {}]
  %s5 = inlined_call_operand.vmem [shape: f32[8,1], index: 5, kind: input, shape index: {}]
  %s6 = inlined_call_operand.vmem [shape: f32[8,200], index: 6, kind: output, shape index: {}]
  %s7 = sld [smem:[#allocation0]]
  $region57: #{classify_header3_forward.1} parent=0
    _
  %s9 = ssub.s32 1, %s7
  %s10 = scalar_select 0, %s9, %s7
  loop: start=0, step=1, limit=4
  $region2: #{classify_header3_forward.1} parent=0 // loop_pre_header
    _
  $region3: #{classify_header3_forward.1} parent=0 // loop_header
    %s12 = sphi 0, %s16
    %p13 = scmp.ge.s32.totalorder %s12, 4
    %s22 = sphi 0, %s24
    %s25 = sphi 0, %s22
    %s26 = sphi 0, %s25
    %s42 = sphi 0, %s26
    %s48 = sphi 0, %s50
    %s51 = sphi 0, %s48
    %s52 = sphi 0, %s51
    %s68 = sphi 0, %s52
    %s72 = sphi 0, %s72
    %s74 = sphi 0, %s72
    %s75 = sphi 0, %s74
    %s89 = sphi 0, %s75
    %s93 = sphi 0, %s93
    %s95 = sphi 0, %s93
    %s96 = sphi 0, %s95
    %s110 = sphi 0, %s96
    %s114 = sphi 0, %s114
    %s116 = sphi 0, %s114
    %s117 = sphi 0, %s116
    %s131 = sphi 0, %s117
    %s135 = sphi 0, %s135
    %s137 = sphi 0, %s135
    %s138 = sphi 0, %s137
    %s152 = sphi 0, %s138
    %s158 = sphi 0, %s160
    %s161 = sphi 0, %s158
    %s162 = sphi 0, %s161
    %s178 = sphi 0, %s162
  $region4: #{classify_header3_forward.1} parent=0 // loop_header_branch
    %15 = sbr.rel (%p13) target = $region8
  $region5: #{classify_header3_forward.1} parent=0 // loop_body
    %s17 = ssub.s32 %s12, 1
    %s18 = ssub.s32 %s12, 2
    %s19 = sadd.s32 %s12, 1
    %s20 = ssub.s32 %s12, %s19
    %p21 = scmp.eq.s32.totalorder %s20, 0
    %s23 = sadd.s32 %s22, 1
    %s24 = scalar_select %p21, %s22, %s23
    %p27 = pneg %p21
    %p28 = scmp.eq.s32.totalorder %s12, 1
    %p29 = por %p27, %p28
    %p30 = scmp.ne.s32.totalorder %s22, %s25
    %p31 = scmp.eq.s32.totalorder %s12, 0
    %p32 = por %p30, %p31
    %p33 = scmp.ne.s32.totalorder %s22, %s25
    %p34 = scmp.eq.s32.totalorder %s17, 1
    %p35 = por %p33, %p34
    %p36 = scmp.ne.s32.totalorder %s25, %s26
    %p37 = scmp.eq.s32.totalorder %s17, 0
    %p38 = por %p36, %p37
    %p39 = scmp.ne.s32.totalorder %s25, %s26
    %p40 = scmp.eq.s32.totalorder %s18, 1
    %p41 = por %p39, %p40
    %p43 = scmp.ne.s32.totalorder %s26, %s42
    %p44 = scmp.eq.s32.totalorder %s18, 0
    %p45 = por %p43, %p44
    %s46 = ssub.s32 %s12, %s19
    %p47 = scmp.eq.s32.totalorder %s46, 0
    %s49 = sadd.s32 %s48, 1
    %s50 = scalar_select %p47, %s48, %s49
    %p53 = pneg %p47
    %p54 = scmp.eq.s32.totalorder %s12, 1
    %p55 = por %p53, %p54
    %p56 = scmp.ne.s32.totalorder %s48, %s51
    %p57 = scmp.eq.s32.totalorder %s12, 0
    %p58 = por %p56, %p57
    %p59 = scmp.ne.s32.totalorder %s48, %s51
    %p60 = scmp.eq.s32.totalorder %s17, 1
    %p61 = por %p59, %p60
    %p62 = scmp.ne.s32.totalorder %s51, %s52
    %p63 = scmp.eq.s32.totalorder %s17, 0
    %p64 = por %p62, %p63
    %p65 = scmp.ne.s32.totalorder %s51, %s52
    %p66 = scmp.eq.s32.totalorder %s18, 1
    %p67 = por %p65, %p66
    %p69 = scmp.ne.s32.totalorder %s52, %s68
    %p70 = scmp.eq.s32.totalorder %s18, 0
    %p71 = por %p69, %p70
    %s73 = sadd.s32 %s72, 1
    %p76 = scmp.eq.s32.totalorder %s12, 1
    %p77 = scmp.ne.s32.totalorder %s72, %s74
    %p78 = scmp.eq.s32.totalorder %s12, 0
    %p79 = por %p77, %p78
    %p80 = scmp.ne.s32.totalorder %s72, %s74
    %p81 = scmp.eq.s32.totalorder %s17, 1
    %p82 = por %p80, %p81
    %p83 = scmp.ne.s32.totalorder %s74, %s75
    %p84 = scmp.eq.s32.totalorder %s17, 0
    %p85 = por %p83, %p84
    %p86 = scmp.ne.s32.totalorder %s74, %s75
    %p87 = scmp.eq.s32.totalorder %s18, 1
    %p88 = por %p86, %p87
    %p90 = scmp.ne.s32.totalorder %s75, %s89
    %p91 = scmp.eq.s32.totalorder %s18, 0
    %p92 = por %p90, %p91
    %s94 = sadd.s32 %s93, 1
    %p97 = scmp.eq.s32.totalorder %s12, 1
    %p98 = scmp.ne.s32.totalorder %s93, %s95
    %p99 = scmp.eq.s32.totalorder %s12, 0
    %p100 = por %p98, %p99
    %p101 = scmp.ne.s32.totalorder %s93, %s95
    %p102 = scmp.eq.s32.totalorder %s17, 1
    %p103 = por %p101, %p102
    %p104 = scmp.ne.s32.totalorder %s95, %s96
    %p105 = scmp.eq.s32.totalorder %s17, 0
    %p106 = por %p104, %p105
    %p107 = scmp.ne.s32.totalorder %s95, %s96
    %p108 = scmp.eq.s32.totalorder %s18, 1
    %p109 = por %p107, %p108
    %p111 = scmp.ne.s32.totalorder %s96, %s110
    %p112 = scmp.eq.s32.totalorder %s18, 0
    %p113 = por %p111, %p112
    %s115 = sadd.s32 %s114, 1
    %p118 = scmp.eq.s32.totalorder %s12, 1
    %p119 = scmp.ne.s32.totalorder %s114, %s116
    %p120 = scmp.eq.s32.totalorder %s12, 0
    %p121 = por %p119, %p120
    %p122 = scmp.ne.s32.totalorder %s114, %s116
    %p123 = scmp.eq.s32.totalorder %s17, 1
    %p124 = por %p122, %p123
    %p125 = scmp.ne.s32.totalorder %s116, %s117
    %p126 = scmp.eq.s32.totalorder %s17, 0
    %p127 = por %p125, %p126
    %p128 = scmp.ne.s32.totalorder %s116, %s117
    %p129 = scmp.eq.s32.totalorder %s18, 1
    %p130 = por %p128, %p129
    %p132 = scmp.ne.s32.totalorder %s117, %s131
    %p133 = scmp.eq.s32.totalorder %s18, 0
    %p134 = por %p132, %p133
    %s136 = sadd.s32 %s135, 1
    %p139 = scmp.eq.s32.totalorder %s12, 1
    %p140 = scmp.ne.s32.totalorder %s135, %s137
    %p141 = scmp.eq.s32.totalorder %s12, 0
    %p142 = por %p140, %p141
    %p143 = scmp.ne.s32.totalorder %s135, %s137
    %p144 = scmp.eq.s32.totalorder %s17, 1
    %p145 = por %p143, %p144
    %p146 = scmp.ne.s32.totalorder %s137, %s138
    %p147 = scmp.eq.s32.totalorder %s17, 0
    %p148 = por %p146, %p147
    %p149 = scmp.ne.s32.totalorder %s137, %s138
    %p150 = scmp.eq.s32.totalorder %s18, 1
    %p151 = por %p149, %p150
    %p153 = scmp.ne.s32.totalorder %s138, %s152
    %p154 = scmp.eq.s32.totalorder %s18, 0
    %p155 = por %p153, %p154
    %s156 = ssub.s32 %s12, %s19
    %p157 = scmp.eq.s32.totalorder %s156, 0
    %s159 = sadd.s32 %s158, 1
    %s160 = scalar_select %p157, %s158, %s159
    %p163 = pneg %p157
    %p164 = scmp.eq.s32.totalorder %s12, 1
    %p165 = por %p163, %p164
    %p166 = scmp.ne.s32.totalorder %s158, %s161
    %p167 = scmp.eq.s32.totalorder %s12, 0
    %p168 = por %p166, %p167
    %p169 = scmp.ne.s32.totalorder %s158, %s161
    %p170 = scmp.eq.s32.totalorder %s17, 1
    %p171 = por %p169, %p170
    %p172 = scmp.ne.s32.totalorder %s161, %s162
    %p173 = scmp.eq.s32.totalorder %s17, 0
    %p174 = por %p172, %p173
    %p175 = scmp.ne.s32.totalorder %s161, %s162
    %p176 = scmp.eq.s32.totalorder %s18, 1
    %p177 = por %p175, %p176
    %p179 = scmp.ne.s32.totalorder %s162, %s178
    %p180 = scmp.eq.s32.totalorder %s18, 0
    %p181 = por %p179, %p180
    %p182 = scmp.le.s32.totalorder 1, %s12
    %p183 = scmp.lt.s32.totalorder %s12, 3
    %p184 = pnand %p182, %p183
    %p185 = pneg %p184
    // Predicated region
    $region9: #{classify_header3_forward.1} parent=5 // pred_check
      _
    $region10: #{classify_header3_forward.1} parent=5 // pred_check_branch
      %187 = sbr.rel (%p184) target = $region12
    $region11: #{classify_header3_forward.1} parent=5 // pred_region
      %s188 = ssub.s32 %s12, 1
      // Predicated region
      $region13: #{classify_header3_forward.1} parent=11 // pred_check
        %p189 = pneg %p85
      $region14: #{classify_header3_forward.1} parent=11 // pred_check_branch
        %191 = sbr.rel (%p189) target = $region16
      $region15: #{classify_header3_forward.1} parent=11 // pred_region
        _
      $region16: #{classify_header3_forward.1} parent=11 // pred_fallthru
        _
      // Predicated region
      $region17: #{classify_header3_forward.1} parent=11 // pred_check
        %p192 = pneg %p106
      $region18: #{classify_header3_forward.1} parent=11 // pred_check_branch
        %194 = sbr.rel (%p192) target = $region20
      $region19: #{classify_header3_forward.1} parent=11 // pred_region
        _
      $region20: #{classify_header3_forward.1} parent=11 // pred_fallthru
        _
      // Predicated region
      $region21: #{classify_header3_forward.1} parent=11 // pred_check
        %p195 = pneg %p127
      $region22: #{classify_header3_forward.1} parent=11 // pred_check_branch
        %197 = sbr.rel (%p195) target = $region24
      $region23: #{classify_header3_forward.1} parent=11 // pred_region
        _
      $region24: #{classify_header3_forward.1} parent=11 // pred_fallthru
        _
      // Predicated region
      $region25: #{classify_header3_forward.1} parent=11 // pred_check
        %p198 = pneg %p148
      $region26: #{classify_header3_forward.1} parent=11 // pred_check_branch
        %200 = sbr.rel (%p198) target = $region28
      $region27: #{classify_header3_forward.1} parent=11 // pred_region
        _
      $region28: #{classify_header3_forward.1} parent=11 // pred_fallthru
        _
    $region12: #{classify_header3_forward.1} parent=5 // pred_fallthru
      _
    %p201 = scmp.lt.s32.totalorder %s12, 2
    // Predicated region
    $region29: #{classify_header3_forward.1} parent=5 // pred_check
      %p202 = pneg %p201
    $region30: #{classify_header3_forward.1} parent=5 // pred_check_branch
      %204 = sbr.rel (%p202) target = $region32
    $region31: #{classify_header3_forward.1} parent=5 // pred_region
      // Predicated region
      $region33: #{classify_header3_forward.1} parent=31 // pred_check
        %p205 = pneg %p32
      $region34: #{classify_header3_forward.1} parent=31 // pred_check_branch
        %207 = sbr.rel (%p205) target = $region36
      $region35: #{classify_header3_forward.1} parent=31 // pred_region
        %s208 = smul.u32 16, %s12
        %s209 = ssub.s32 25, %s208
        %p210 = scmp.lt.s32.totalorder %s209, 16
        %s211 = scalar_select %p210, %s209, 16
        %s212 = smul.u32 8, %s211
        %p213 = scmp.lt.s32.totalorder %s208, 24
        %s214 = scalar_select %p213, %s208, 24
        %s215 = smul.addr %s214, 8
        %s216 = scalar_lea.vmem %s0, %s215
        %s217 = smul.u32 16, %s12
        %s218 = ssub.s32 25, %s217
        %p219 = scmp.lt.s32.totalorder %s218, 16
        %s220 = scalar_select %p219, %s218, 16
        %s221 = smul.u32 8, %s220
      $region36: #{classify_header3_forward.1} parent=31 // pred_fallthru
        _
      // Predicated region
      $region37: #{classify_header3_forward.1} parent=31 // pred_check
        %p222 = pneg %p58
      $region38: #{classify_header3_forward.1} parent=31 // pred_check_branch
        %224 = sbr.rel (%p222) target = $region40
      $region39: #{classify_header3_forward.1} parent=31 // pred_region
        %s225 = smul.u32 16, %s12
        %s226 = ssub.s32 25, %s225
        %p227 = scmp.lt.s32.totalorder %s226, 16
        %s228 = scalar_select %p227, %s226, 16
        %s229 = smul.u32 8, %s228
        %p230 = scmp.lt.s32.totalorder %s225, 24
        %s231 = scalar_select %p230, %s225, 24
        %s232 = smul.addr %s231, 8
        %s233 = scalar_lea.vmem %s1, %s232
        %s234 = smul.u32 16, %s12
        %s235 = ssub.s32 25, %s234
        %p236 = scmp.lt.s32.totalorder %s235, 16
        %s237 = scalar_select %p236, %s235, 16
        %s238 = smul.u32 8, %s237
      $region40: #{classify_header3_forward.1} parent=31 // pred_fallthru
        _
    $region32: #{classify_header3_forward.1} parent=5 // pred_fallthru
      _
    %p239 = scmp.le.s32.totalorder 1, %s12
    %p240 = scmp.lt.s32.totalorder %s12, 3
    %p241 = pnand %p239, %p240
    %p242 = pneg %p241
    // Predicated region
    $region41: #{classify_header3_forward.1} parent=5 // pred_check
      _
    $region42: #{classify_header3_forward.1} parent=5 // pred_check_branch
      %244 = sbr.rel (%p241) target = $region44
    $region43: #{classify_header3_forward.1} parent=5 // pred_region
      %s245 = ssub.s32 %s12, 1
      %s246 = smul.u32 16, %s17
      %s247 = ssub.s32 25, %s246
      %p248 = scmp.lt.s32.totalorder %s247, 16
      %s249 = scalar_select %p248, %s247, 16
      %s250 = smul.u32 8, %s249
      %p251 = scmp.lt.s32.totalorder %s246, 24
      %s252 = scalar_select %p251, %s246, 24
      %s253 = smul.addr %s252, 8
      %s254 = scalar_lea.vmem %s0, %s253
      %p255 = pneg %p38
      %p256 = pneg %p35
      %s257 = smul.u32 16, %s17
      %s258 = ssub.s32 25, %s257
      %p259 = scmp.lt.s32.totalorder %s258, 16
      %s260 = scalar_select %p259, %s258, 16
      %s261 = smul.u32 8, %s260
      %p262 = scmp.lt.s32.totalorder %s257, 24
      %s263 = scalar_select %p262, %s257, 24
      %s264 = smul.addr %s263, 8
      %s265 = scalar_lea.vmem %s1, %s264
      %p266 = pneg %p64
      %p267 = pneg %p61
      %p268 = pneg %p85
      %p269 = pneg %p82
      %p270 = pneg %p106
      %p271 = pneg %p103
      %p272 = pneg %p127
      %p273 = pneg %p124
      %p274 = pneg %p148
      %p275 = pneg %p145
      %p276 = pneg %p174
      %p277 = pneg %p171
      %p278 = scmp.lt.s32.totalorder %s17, 1
      %s279 = scalar_select %p278, %s17, 1
      %s280 = smul.addr %s279, 8
      %s281 = scalar_lea.vmem %s6, %s280
      %s282 = smul.u32 16, %s17
      %s283 = ssub.s32 25, %s282
      %p284 = scmp.lt.s32.totalorder %s283, 16
      %s285 = scalar_select %p284, %s283, 16
      %s286 = smul.u32 8, %s285
      %p287 = scmp.lt.s32.totalorder %s282, 24
      %s288 = scalar_select %p287, %s282, 24
      %s289 = smul.addr %s288, 8
      %s290 = scalar_lea.vmem %s0, %s289
      %s291 = smul.u32 16, %s17
      %s292 = ssub.s32 25, %s291
      %p293 = scmp.lt.s32.totalorder %s292, 16
      %s294 = scalar_select %p293, %s292, 16
      %s295 = smul.u32 8, %s294
      %s296 = smul.u32 16, %s17
      %s297 = ssub.s32 25, %s296
      %p298 = scmp.lt.s32.totalorder %s297, 16
      %s299 = scalar_select %p298, %s297, 16
      %s300 = smul.u32 8, %s299
      %p301 = scmp.lt.s32.totalorder %s296, 24
      %s302 = scalar_select %p301, %s296, 24
      %s303 = smul.addr %s302, 8
      %s304 = scalar_lea.vmem %s1, %s303
      %s305 = smul.u32 16, %s17
      %s306 = ssub.s32 25, %s305
      %p307 = scmp.lt.s32.totalorder %s306, 16
      %s308 = scalar_select %p307, %s306, 16
      %s309 = smul.u32 8, %s308
      %p310 = scmp.lt.s32.totalorder %s17, 1
      %s311 = scalar_select %p310, %s17, 1
      %s312 = smul.addr %s311, 8
      %s313 = scalar_lea.vmem %s6, %s312
      %v315 = vld [vmem:[%s290] sm:$0xff]
      %v316 = vld [vmem:[%s290 + $0x8] sm:$0xff]
      %v317 = vld [vmem:[%s290 + $0x10] sm:$0xff]
      %v318 = vld [vmem:[%s290 + $0x18] sm:$0xff]
      %v319 = vld [vmem:[%s290 + $0x20] sm:$0xff]
      %v320 = vld [vmem:[%s290 + $0x28] sm:$0xff]
      %v321 = vld [vmem:[%s290 + $0x30] sm:$0xff]
      %v322 = vld [vmem:[%s290 + $0x38] sm:$0xff]
      %v323 = vld [vmem:[%s290 + $0x40] sm:$0xff]
      %v324 = vld [vmem:[%s290 + $0x48] sm:$0xff]
      %v325 = vld [vmem:[%s290 + $0x50] sm:$0xff]
      %v326 = vld [vmem:[%s290 + $0x58] sm:$0xff]
      %v327 = vld [vmem:[%s290 + $0x60] sm:$0xff]
      %v328 = vld [vmem:[%s290 + $0x68] sm:$0xff]
      %v329 = vld [vmem:[%s290 + $0x70] sm:$0xff]
      %v330 = vld [vmem:[%s290 + $0x78] sm:$0xff]
      %v331 = vld [vmem:[%s304] sm:$0xff]
      %v332 = vld [vmem:[%s304 + $0x8] sm:$0xff]
      %v333 = vld [vmem:[%s304 + $0x10] sm:$0xff]
      %v334 = vld [vmem:[%s304 + $0x18] sm:$0xff]
      %v335 = vld [vmem:[%s304 + $0x20] sm:$0xff]
      %v336 = vld [vmem:[%s304 + $0x28] sm:$0xff]
      %v337 = vld [vmem:[%s304 + $0x30] sm:$0xff]
      %v338 = vld [vmem:[%s304 + $0x38] sm:$0xff]
      %v339 = vld [vmem:[%s304 + $0x40] sm:$0xff]
      %v340 = vld [vmem:[%s304 + $0x48] sm:$0xff]
      %v341 = vld [vmem:[%s304 + $0x50] sm:$0xff]
      %v342 = vld [vmem:[%s304 + $0x58] sm:$0xff]
      %v343 = vld [vmem:[%s304 + $0x60] sm:$0xff]
      %v344 = vld [vmem:[%s304 + $0x68] sm:$0xff]
      %v345 = vld [vmem:[%s304 + $0x70] sm:$0xff]
      %v346 = vld [vmem:[%s304 + $0x78] sm:$0xff]
      %v347 = vmul.f32 %v315, %v331
      %v348 = vmul.f32 %v316, %v332
      %v349 = vmul.f32 %v317, %v333
      %v350 = vmul.f32 %v318, %v334
      %v351 = vmul.f32 %v319, %v335
      %v352 = vmul.f32 %v320, %v336
      %v353 = vmul.f32 %v321, %v337
      %v354 = vmul.f32 %v322, %v338
      %v355 = vmul.f32 %v323, %v339
      %v356 = vmul.f32 %v324, %v340
      %v357 = vmul.f32 %v325, %v341
      %v358 = vmul.f32 %v326, %v342
      %v359 = vmul.f32 %v327, %v343
      %v360 = vmul.f32 %v328, %v344
      %v361 = vmul.f32 %v329, %v345
      %v362 = vmul.f32 %v330, %v346
      %v363 = vpack.c.bf16 %v348, %v347
      %v364 = vpack.c.bf16 %v350, %v349
      %v365 = vpack.c.bf16 %v352, %v351
      %v366 = vpack.c.bf16 %v354, %v353
      %v367 = vpack.c.bf16 %v356, %v355
      %v368 = vpack.c.bf16 %v358, %v357
      %v369 = vpack.c.bf16 %v360, %v359
      %v370 = vpack.c.bf16 %v362, %v361
      %v371 = vld [vmem:[%s2] sm:$0xf]
      %v372 = vld [vmem:[%s2 + $0x4] sm:$0xf]
      %v373 = vld [vmem:[%s2 + $0x8] sm:$0xf]
      %v374 = vld [vmem:[%s2 + $0xc] sm:$0xf]
      %v375 = vld [vmem:[%s2 + $0x10] sm:$0xf]
      %v376 = vld [vmem:[%s2 + $0x14] sm:$0xf]
      %v377 = vld [vmem:[%s2 + $0x18] sm:$0xf]
      %v378 = vld [vmem:[%s2 + $0x1c] sm:$0xf]
      %v379 = vld [vmem:[%s3] sm:$0x1]
      %v381 = vperm.slane %v379, 0
      %v391 = vunpack.c.l.b16 %v371
      %v392 = vunpack.c.l.b16 %v372
      %v393 = vunpack.c.l.b16 %v373
      %v394 = vunpack.c.l.b16 %v374
      %v395 = vunpack.c.l.b16 %v375
      %v396 = vunpack.c.l.b16 %v376
      %v397 = vunpack.c.l.b16 %v377
      %v398 = vunpack.c.l.b16 %v378
      %v399 = vpack.c.b16 %v392, %v391
      %v400 = vpack.c.b16 %v394, %v393
      %v401 = vpack.c.b16 %v396, %v395
      %v402 = vpack.c.b16 %v398, %v397
      %vm407 = vcmask 523264
      %v409 = vsel %vm407, %v363, 0
      %v412 = vsel %vm407, %v364, 0
      %v415 = vsel %vm407, %v365, 0
      %v418 = vsel %vm407, %v366, 0
      %v421 = vsel %vm407, %v367, 0
      %v424 = vsel %vm407, %v368, 0
      %v427 = vsel %vm407, %v369, 0
      %v430 = vsel %vm407, %v370, 0
      %432 = vmatpush.bf16.msra.mxu0 0
      %433 = vmatpush.bf16.msra.mxu0 0
      %434 = vmatpush.bf16.msra.mxu0 0
      %435 = vmatpush.bf16.msra.mxu0 0
      %436 = vmatpush.bf16.msra.mxu0 %v402
      %437 = vmatpush.bf16.msra.mxu0 %v401
      %438 = vmatpush.bf16.msra.mxu0 %v400
      %439 = vmatpush.bf16.msra.mxu0 %v399
      %440 = vmatmul.bf16.gmra.mxu0 %v409
      %v441 = vpop.f32.mrf.mxu0
      %v442 = vadd.f32 %v381, %v441
      %v443 = vpop.f32.mrf.mxu0
      %v444 = vadd.f32 %v381, %v443
      %445 = vmatmul.bf16.gmra.mxu0 %v412
      %v446 = vpop.f32.mrf.mxu0
      %v447 = vadd.f32 %v381, %v446
      %v448 = vpop.f32.mrf.mxu0
      %v449 = vadd.f32 %v381, %v448
      %450 = vmatmul.bf16.gmra.mxu0 %v415
      %v451 = vpop.f32.mrf.mxu0
      %v452 = vadd.f32 %v381, %v451
      %v453 = vpop.f32.mrf.mxu0
      %v454 = vadd.f32 %v381, %v453
      %455 = vmatmul.bf16.gmra.mxu0 %v418
      %v456 = vpop.f32.mrf.mxu0
      %v457 = vadd.f32 %v381, %v456
      %v458 = vpop.f32.mrf.mxu0
      %v459 = vadd.f32 %v381, %v458
      %460 = vmatmul.bf16.gmra.mxu0 %v421
      %v461 = vpop.f32.mrf.mxu0
      %v462 = vadd.f32 %v381, %v461
      %v463 = vpop.f32.mrf.mxu0
      %v464 = vadd.f32 %v381, %v463
      %465 = vmatmul.bf16.gmra.mxu0 %v424
      %v466 = vpop.f32.mrf.mxu0
      %v467 = vadd.f32 %v381, %v466
      %v468 = vpop.f32.mrf.mxu0
      %v469 = vadd.f32 %v381, %v468
      %470 = vmatmul.bf16.gmra.mxu0 %v427
      %v471 = vpop.f32.mrf.mxu0
      %v472 = vadd.f32 %v381, %v471
      %v473 = vpop.f32.mrf.mxu0
      %v474 = vadd.f32 %v381, %v473
      %475 = vmatmul.bf16.gmra.mxu0 %v430
      %v476 = vpop.f32.mrf.mxu0
      %v477 = vadd.f32 %v381, %v476
      %v478 = vpop.f32.mrf.mxu0
      %v479 = vadd.f32 %v381, %v478
      %480 = vdwg.mxu0
      %v481 = vsub.f32 0.0, %v442
      %v482 = vsub.f32 0.0, %v444
      %v483 = vsub.f32 0.0, %v447
      %v484 = vsub.f32 0.0, %v449
      %v485 = vsub.f32 0.0, %v452
      %v486 = vsub.f32 0.0, %v454
      %v487 = vsub.f32 0.0, %v457
      %v488 = vsub.f32 0.0, %v459
      %v489 = vsub.f32 0.0, %v462
      %v490 = vsub.f32 0.0, %v464
      %v491 = vsub.f32 0.0, %v467
      %v492 = vsub.f32 0.0, %v469
      %v493 = vsub.f32 0.0, %v472
      %v494 = vsub.f32 0.0, %v474
      %v495 = vsub.f32 0.0, %v477
      %v496 = vsub.f32 0.0, %v479
      %v497 = vmul.f32 %v481, 1.442695
      %v498 = vpow.pop %v497
      %v499 = vmul.f32 %v482, 1.442695
      %v500 = vpow.pop %v499
      %v501 = vmul.f32 %v483, 1.442695
      %v502 = vpow.pop %v501
      %v503 = vmul.f32 %v484, 1.442695
      %v504 = vpow.pop %v503
      %v505 = vmul.f32 %v485, 1.442695
      %v506 = vpow.pop %v505
      %v507 = vmul.f32 %v486, 1.442695
      %v508 = vpow.pop %v507
      %v509 = vmul.f32 %v487, 1.442695
      %v510 = vpow.pop %v509
      %v511 = vmul.f32 %v488, 1.442695
      %v512 = vpow.pop %v511
      %v513 = vmul.f32 %v489, 1.442695
      %v514 = vpow.pop %v513
      %v515 = vmul.f32 %v490, 1.442695
      %v516 = vpow.pop %v515
      %v517 = vmul.f32 %v491, 1.442695
      %v518 = vpow.pop %v517
      %v519 = vmul.f32 %v492, 1.442695
      %v520 = vpow.pop %v519
      %v521 = vmul.f32 %v493, 1.442695
      %v522 = vpow.pop %v521
      %v523 = vmul.f32 %v494, 1.442695
      %v524 = vpow.pop %v523
      %v525 = vmul.f32 %v495, 1.442695
      %v526 = vpow.pop %v525
      %v527 = vmul.f32 %v496, 1.442695
      %v528 = vpow.pop %v527
      %v529 = vadd.f32 %v498, 1.0
      %v530 = vadd.f32 %v500, 1.0
      %v531 = vadd.f32 %v502, 1.0
      %v532 = vadd.f32 %v504, 1.0
      %v533 = vadd.f32 %v506, 1.0
      %v534 = vadd.f32 %v508, 1.0
      %v535 = vadd.f32 %v510, 1.0
      %v536 = vadd.f32 %v512, 1.0
      %v537 = vadd.f32 %v514, 1.0
      %v538 = vadd.f32 %v516, 1.0
      %v539 = vadd.f32 %v518, 1.0
      %v540 = vadd.f32 %v520, 1.0
      %v541 = vadd.f32 %v522, 1.0
      %v542 = vadd.f32 %v524, 1.0
      %v543 = vadd.f32 %v526, 1.0
      %v544 = vadd.f32 %v528, 1.0
      %v545 = vrcp.pop %v529
      %v546 = vmul.f32 %v529, %v545
      %v547 = vsub.f32 1.0, %v546
      %v548 = vmul.f32 %v545, %v547
      %v549 = vadd.f32 %v545, %v548
      %vm550 = vweird.f32 %v529
      %vm551 = vweird.f32 %v545
      %vm552 = vmor %vm550, %vm551
      %v553 = vsel %vm552, %v545, %v549
      %v554 = vand.u32 2147483647, %v529
      %vm555 = vcmp.eq.f32.partialorder %v554, 8.507059e+37
      %v556 = vand.u32 %v529, 2147483648
      %v557 = vor.u32 1.1754944e-38, %v556
      %v558 = vsel %vm555, %v557, %v553
      %v559 = vmul.f32 1.0, %v558
      %v560 = vrcp.pop %v530
      %v561 = vmul.f32 %v530, %v560
      %v562 = vsub.f32 1.0, %v561
      %v563 = vmul.f32 %v560, %v562
      %v564 = vadd.f32 %v560, %v563
      %vm565 = vweird.f32 %v530
      %vm566 = vweird.f32 %v560
      %vm567 = vmor %vm565, %vm566
      %v568 = vsel %vm567, %v560, %v564
      %v569 = vand.u32 2147483647, %v530
      %vm570 = vcmp.eq.f32.partialorder %v569, 8.507059e+37
      %v571 = vand.u32 %v530, 2147483648
      %v572 = vor.u32 1.1754944e-38, %v571
      %v573 = vsel %vm570, %v572, %v568
      %v574 = vmul.f32 1.0, %v573
      %v575 = vrcp.pop %v531
      %v576 = vmul.f32 %v531, %v575
      %v577 = vsub.f32 1.0, %v576
      %v578 = vmul.f32 %v575, %v577
      %v579 = vadd.f32 %v575, %v578
      %vm580 = vweird.f32 %v531
      %vm581 = vweird.f32 %v575
      %vm582 = vmor %vm580, %vm581
      %v583 = vsel %vm582, %v575, %v579
      %v584 = vand.u32 2147483647, %v531
      %vm585 = vcmp.eq.f32.partialorder %v584, 8.507059e+37
      %v586 = vand.u32 %v531, 2147483648
      %v587 = vor.u32 1.1754944e-38, %v586
      %v588 = vsel %vm585, %v587, %v583
      %v589 = vmul.f32 1.0, %v588
      %v590 = vrcp.pop %v532
      %v591 = vmul.f32 %v532, %v590
      %v592 = vsub.f32 1.0, %v591
      %v593 = vmul.f32 %v590, %v592
      %v594 = vadd.f32 %v590, %v593
      %vm595 = vweird.f32 %v532
      %vm596 = vweird.f32 %v590
      %vm597 = vmor %vm595, %vm596
      %v598 = vsel %vm597, %v590, %v594
      %v599 = vand.u32 2147483647, %v532
      %vm600 = vcmp.eq.f32.partialorder %v599, 8.507059e+37
      %v601 = vand.u32 %v532, 2147483648
      %v602 = vor.u32 1.1754944e-38, %v601
      %v603 = vsel %vm600, %v602, %v598
      %v604 = vmul.f32 1.0, %v603
      %v605 = vrcp.pop %v533
      %v606 = vmul.f32 %v533, %v605
      %v607 = vsub.f32 1.0, %v606
      %v608 = vmul.f32 %v605, %v607
      %v609 = vadd.f32 %v605, %v608
      %vm610 = vweird.f32 %v533
      %vm611 = vweird.f32 %v605
      %vm612 = vmor %vm610, %vm611
      %v613 = vsel %vm612, %v605, %v609
      %v614 = vand.u32 2147483647, %v533
      %vm615 = vcmp.eq.f32.partialorder %v614, 8.507059e+37
      %v616 = vand.u32 %v533, 2147483648
      %v617 = vor.u32 1.1754944e-38, %v616
      %v618 = vsel %vm615, %v617, %v613
      %v619 = vmul.f32 1.0, %v618
      %v620 = vrcp.pop %v534
      %v621 = vmul.f32 %v534, %v620
      %v622 = vsub.f32 1.0, %v621
      %v623 = vmul.f32 %v620, %v622
      %v624 = vadd.f32 %v620, %v623
      %vm625 = vweird.f32 %v534
      %vm626 = vweird.f32 %v620
      %vm627 = vmor %vm625, %vm626
      %v628 = vsel %vm627, %v620, %v624
      %v629 = vand.u32 2147483647, %v534
      %vm630 = vcmp.eq.f32.partialorder %v629, 8.507059e+37
      %v631 = vand.u32 %v534, 2147483648
      %v632 = vor.u32 1.1754944e-38, %v631
      %v633 = vsel %vm630, %v632, %v628
      %v634 = vmul.f32 1.0, %v633
      %v635 = vrcp.pop %v535
      %v636 = vmul.f32 %v535, %v635
      %v637 = vsub.f32 1.0, %v636
      %v638 = vmul.f32 %v635, %v637
      %v639 = vadd.f32 %v635, %v638
      %vm640 = vweird.f32 %v535
      %vm641 = vweird.f32 %v635
      %vm642 = vmor %vm640, %vm641
      %v643 = vsel %vm642, %v635, %v639
      %v644 = vand.u32 2147483647, %v535
      %vm645 = vcmp.eq.f32.partialorder %v644, 8.507059e+37
      %v646 = vand.u32 %v535, 2147483648
      %v647 = vor.u32 1.1754944e-38, %v646
      %v648 = vsel %vm645, %v647, %v643
      %v649 = vmul.f32 1.0, %v648
      %v650 = vrcp.pop %v536
      %v651 = vmul.f32 %v536, %v650
      %v652 = vsub.f32 1.0, %v651
      %v653 = vmul.f32 %v650, %v652
      %v654 = vadd.f32 %v650, %v653
      %vm655 = vweird.f32 %v536
      %vm656 = vweird.f32 %v650
      %vm657 = vmor %vm655, %vm656
      %v658 = vsel %vm657, %v650, %v654
      %v659 = vand.u32 2147483647, %v536
      %vm660 = vcmp.eq.f32.partialorder %v659, 8.507059e+37
      %v661 = vand.u32 %v536, 2147483648
      %v662 = vor.u32 1.1754944e-38, %v661
      %v663 = vsel %vm660, %v662, %v658
      %v664 = vmul.f32 1.0, %v663
      %v665 = vrcp.pop %v537
      %v666 = vmul.f32 %v537, %v665
      %v667 = vsub.f32 1.0, %v666
      %v668 = vmul.f32 %v665, %v667
      %v669 = vadd.f32 %v665, %v668
      %vm670 = vweird.f32 %v537
      %vm671 = vweird.f32 %v665
      %vm672 = vmor %vm670, %vm671
      %v673 = vsel %vm672, %v665, %v669
      %v674 = vand.u32 2147483647, %v537
      %vm675 = vcmp.eq.f32.partialorder %v674, 8.507059e+37
      %v676 = vand.u32 %v537, 2147483648
      %v677 = vor.u32 1.1754944e-38, %v676
      %v678 = vsel %vm675, %v677, %v673
      %v679 = vmul.f32 1.0, %v678
      %v680 = vrcp.pop %v538
      %v681 = vmul.f32 %v538, %v680
      %v682 = vsub.f32 1.0, %v681
      %v683 = vmul.f32 %v680, %v682
      %v684 = vadd.f32 %v680, %v683
      %vm685 = vweird.f32 %v538
      %vm686 = vweird.f32 %v680
      %vm687 = vmor %vm685, %vm686
      %v688 = vsel %vm687, %v680, %v684
      %v689 = vand.u32 2147483647, %v538
      %vm690 = vcmp.eq.f32.partialorder %v689, 8.507059e+37
      %v691 = vand.u32 %v538, 2147483648
      %v692 = vor.u32 1.1754944e-38, %v691
      %v693 = vsel %vm690, %v692, %v688
      %v694 = vmul.f32 1.0, %v693
      %v695 = vrcp.pop %v539
      %v696 = vmul.f32 %v539, %v695
      %v697 = vsub.f32 1.0, %v696
      %v698 = vmul.f32 %v695, %v697
      %v699 = vadd.f32 %v695, %v698
      %vm700 = vweird.f32 %v539
      %vm701 = vweird.f32 %v695
      %vm702 = vmor %vm700, %vm701
      %v703 = vsel %vm702, %v695, %v699
      %v704 = vand.u32 2147483647, %v539
      %vm705 = vcmp.eq.f32.partialorder %v704, 8.507059e+37
      %v706 = vand.u32 %v539, 2147483648
      %v707 = vor.u32 1.1754944e-38, %v706
      %v708 = vsel %vm705, %v707, %v703
      %v709 = vmul.f32 1.0, %v708
      %v710 = vrcp.pop %v540
      %v711 = vmul.f32 %v540, %v710
      %v712 = vsub.f32 1.0, %v711
      %v713 = vmul.f32 %v710, %v712
      %v714 = vadd.f32 %v710, %v713
      %vm715 = vweird.f32 %v540
      %vm716 = vweird.f32 %v710
      %vm717 = vmor %vm715, %vm716
      %v718 = vsel %vm717, %v710, %v714
      %v719 = vand.u32 2147483647, %v540
      %vm720 = vcmp.eq.f32.partialorder %v719, 8.507059e+37
      %v721 = vand.u32 %v540, 2147483648
      %v722 = vor.u32 1.1754944e-38, %v721
      %v723 = vsel %vm720, %v722, %v718
      %v724 = vmul.f32 1.0, %v723
      %v725 = vrcp.pop %v541
      %v726 = vmul.f32 %v541, %v725
      %v727 = vsub.f32 1.0, %v726
      %v728 = vmul.f32 %v725, %v727
      %v729 = vadd.f32 %v725, %v728
      %vm730 = vweird.f32 %v541
      %vm731 = vweird.f32 %v725
      %vm732 = vmor %vm730, %vm731
      %v733 = vsel %vm732, %v725, %v729
      %v734 = vand.u32 2147483647, %v541
      %vm735 = vcmp.eq.f32.partialorder %v734, 8.507059e+37
      %v736 = vand.u32 %v541, 2147483648
      %v737 = vor.u32 1.1754944e-38, %v736
      %v738 = vsel %vm735, %v737, %v733
      %v739 = vmul.f32 1.0, %v738
      %v740 = vrcp.pop %v542
      %v741 = vmul.f32 %v542, %v740
      %v742 = vsub.f32 1.0, %v741
      %v743 = vmul.f32 %v740, %v742
      %v744 = vadd.f32 %v740, %v743
      %vm745 = vweird.f32 %v542
      %vm746 = vweird.f32 %v740
      %vm747 = vmor %vm745, %vm746
      %v748 = vsel %vm747, %v740, %v744
      %v749 = vand.u32 2147483647, %v542
      %vm750 = vcmp.eq.f32.partialorder %v749, 8.507059e+37
      %v751 = vand.u32 %v542, 2147483648
      %v752 = vor.u32 1.1754944e-38, %v751
      %v753 = vsel %vm750, %v752, %v748
      %v754 = vmul.f32 1.0, %v753
      %v755 = vrcp.pop %v543
      %v756 = vmul.f32 %v543, %v755
      %v757 = vsub.f32 1.0, %v756
      %v758 = vmul.f32 %v755, %v757
      %v759 = vadd.f32 %v755, %v758
      %vm760 = vweird.f32 %v543
      %vm761 = vweird.f32 %v755
      %vm762 = vmor %vm760, %vm761
      %v763 = vsel %vm762, %v755, %v759
      %v764 = vand.u32 2147483647, %v543
      %vm765 = vcmp.eq.f32.partialorder %v764, 8.507059e+37
      %v766 = vand.u32 %v543, 2147483648
      %v767 = vor.u32 1.1754944e-38, %v766
      %v768 = vsel %vm765, %v767, %v763
      %v769 = vmul.f32 1.0, %v768
      %v770 = vrcp.pop %v544
      %v771 = vmul.f32 %v544, %v770
      %v772 = vsub.f32 1.0, %v771
      %v773 = vmul.f32 %v770, %v772
      %v774 = vadd.f32 %v770, %v773
      %vm775 = vweird.f32 %v544
      %vm776 = vweird.f32 %v770
      %vm777 = vmor %vm775, %vm776
      %v778 = vsel %vm777, %v770, %v774
      %v779 = vand.u32 2147483647, %v544
      %vm780 = vcmp.eq.f32.partialorder %v779, 8.507059e+37
      %v781 = vand.u32 %v544, 2147483648
      %v782 = vor.u32 1.1754944e-38, %v781
      %v783 = vsel %vm780, %v782, %v778
      %v784 = vmul.f32 1.0, %v783
      %785 = vxpose.xlu0.b32.start [1/16] %v559, 128
      %786 = vxpose.xlu0.b32.cont [2/16] %v574, 128
      %787 = vxpose.xlu0.b32.cont [3/16] %v589, 128
      %788 = vxpose.xlu0.b32.cont [4/16] %v604, 128
      %789 = vxpose.xlu0.b32.cont [5/16] %v619, 128
      %790 = vxpose.xlu0.b32.cont [6/16] %v634, 128
      %791 = vxpose.xlu0.b32.cont [7/16] %v649, 128
      %792 = vxpose.xlu0.b32.cont [8/16] %v664, 128
      %793 = vxpose.xlu0.b32.cont [9/16] %v679, 128
      %794 = vxpose.xlu0.b32.cont [10/16] %v694, 128
      %795 = vxpose.xlu0.b32.cont [11/16] %v709, 128
      %796 = vxpose.xlu0.b32.cont [12/16] %v724, 128
      %797 = vxpose.xlu0.b32.cont [13/16] %v739, 128
      %798 = vxpose.xlu0.b32.cont [14/16] %v754, 128
      %799 = vxpose.xlu0.b32.cont [15/16] %v769, 128
      %800 = vxpose.xlu0.b32.end [16/16] %v784, 128
      %v801 = vpop.trf.xlu0
      %v802 = vpop.trf.xlu0
      %v803 = vpop.trf.xlu0
      %v804 = vpop.trf.xlu0
      %v805 = vpop.trf.xlu0
      %v806 = vpop.trf.xlu0
      %v807 = vpop.trf.xlu0
      %v808 = vpop.trf.xlu0
      %v809 = vpop.trf.xlu0
      %v810 = vpop.trf.xlu0
      %v811 = vpop.trf.xlu0
      %v812 = vpop.trf.xlu0
      %v813 = vpop.trf.xlu0
      %v814 = vpop.trf.xlu0
      %v815 = vpop.trf.xlu0
      %v816 = vpop.trf.xlu0
      %v817 = vpack.c.bf16 %v802, %v801
      %v818 = vpack.c.bf16 %v804, %v803
      %v819 = vpack.c.bf16 %v806, %v805
      %v820 = vpack.c.bf16 %v808, %v807
      %v821 = vpack.c.bf16 %v810, %v809
      %v822 = vpack.c.bf16 %v812, %v811
      %v823 = vpack.c.bf16 %v814, %v813
      %v824 = vpack.c.bf16 %v816, %v815
      %v825 = vld [vmem:[%s4] sm:$0xf]
      %v826 = vld [vmem:[%s5] sm:$0xff]
      %828 = vset.pattern.permute.xlu0 0
      %829 = vperm.xlu0 %828, %v826
      %v830 = vpop.permute.xlu0 %829
      %832 = vmatpush.bf16.msra.mxu0 %v824
      %833 = vmatpush.bf16.msra.mxu0 %v823
      %834 = vmatpush.bf16.msra.mxu0 %v822
      %835 = vmatpush.bf16.msra.mxu0 %v821
      %836 = vmatpush.bf16.msra.mxu0 %v820
      %837 = vmatpush.bf16.msra.mxu0 %v819
      %838 = vmatpush.bf16.msra.mxu0 %v818
      %839 = vmatpush.bf16.msra.mxu0 %v817
      %840 = vmatmul.bf16.gmra.mxu0 %v825
      %v841 = vpop.f32.mrf.mxu0
      %v842 = vadd.f32 %v830, %v841
      %v843 = vpop.f32.mrf.mxu0
      %844 = vdwg.mxu0
      %845 = vst [vmem:[%s313] sm:$0xff] %v842
      %p846 = scmp.lt.s32.totalorder %s17, 1
      %s847 = scalar_select %p846, %s17, 1
      %s848 = smul.addr %s847, 8
      %s849 = scalar_lea.vmem %s6, %s848
      // Predicated region
      $region45: #{classify_header3_forward.1} parent=43 // pred_check
        %p850 = pneg %p171
      $region46: #{classify_header3_forward.1} parent=43 // pred_check_branch
        %852 = sbr.rel (%p850) target = $region48
      $region47: #{classify_header3_forward.1} parent=43 // pred_region
        _
      $region48: #{classify_header3_forward.1} parent=43 // pred_fallthru
        _
    $region44: #{classify_header3_forward.1} parent=5 // pred_fallthru
      _
    %p853 = scmp.le.s32.totalorder 2, %s12
    // Predicated region
    $region49: #{classify_header3_forward.1} parent=5 // pred_check
      %p854 = pneg %p853
    $region50: #{classify_header3_forward.1} parent=5 // pred_check_branch
      %856 = sbr.rel (%p854) target = $region52
    $region51: #{classify_header3_forward.1} parent=5 // pred_region
      %s857 = ssub.s32 %s12, 2
      // Predicated region
      $region53: #{classify_header3_forward.1} parent=51 // pred_check
        %p858 = pneg %p177
      $region54: #{classify_header3_forward.1} parent=51 // pred_check_branch
        %860 = sbr.rel (%p858) target = $region56
      $region55: #{classify_header3_forward.1} parent=51 // pred_region
        %p861 = scmp.lt.s32.totalorder %s18, 1
        %s862 = scalar_select %p861, %s18, 1
        %s863 = smul.addr %s862, 8
        %s864 = scalar_lea.vmem %s6, %s863
      $region56: #{classify_header3_forward.1} parent=51 // pred_fallthru
        _
    $region52: #{classify_header3_forward.1} parent=5 // pred_fallthru
      _
  $region6: #{classify_header3_forward.1} parent=0 // loop_footer
    %s16 = sadd.s32 1, %s12
  $region7: #{classify_header3_forward.1} parent=0 // loop_footer_branch
    %11 = sbr.rel target = $region3
  $region8: #{classify_header3_forward.1} parent=0 // loop_exit
    _

</llo_original>
